<compile_context>
chip_gen: v7x
topology: tpu7x:2x2x1
jax: 0.10.0
libtpu: 0.0.40
codegen_flags: <defaults>
</compile_context>

<pallas_src>
import functools

import jax
import jax.numpy as jnp
from jax.experimental import pallas as pl
from jax.experimental.pallas import tpu as pltpu


def _cdiv(a: int, b: int) -> int:
    return -(-a // b)


def _round_up(x: int, m: int) -> int:
    return _cdiv(x, m) * m


def _vmem_capacity_bytes() -> int:
    """Per-core VMEM capacity; conservative v7x default if query fails."""
    try:
        info = pltpu.get_tpu_info()
        cap = int(getattr(info, "vmem_capacity_bytes", 0))
        if cap > 0:
            return cap
    except Exception:
        pass
    return 64 << 20


def _pick_tile_m(B: int, max_rows: int = 512) -> int:
    """M tile: multiple of 8 (or full B), >= 2 blocks when possible (v7x dual
    TC), and last-tile padding always < one tile (no hard 256/512 cutoff)."""
    if B <= 8:
        return B
    n_blocks = max(2, _cdiv(B, max_rows))
    return _round_up(_cdiv(B, n_blocks), 8)


# ----------------------------------------------------------------------------
# Kernels
# ----------------------------------------------------------------------------
def _fused_kernel(msg_ref, w_ref, b_ref, out_ref, *, compute_dtype):
    """Whole weight resident in VMEM; one dot per M tile, bias fused, no
    accumulator scratch, single lane-dense store."""
    acc = jnp.dot(
        msg_ref[...].astype(compute_dtype),
        w_ref[...].astype(compute_dtype),
        preferred_element_type=jnp.float32,
    )
    out_ref[...] = (acc + b_ref[...]).astype(out_ref.dtype)


def _make_tiled_kernel(d_in: int, tile_k: int, compute_dtype, needs_k_mask: bool):
    """(M, N, K) tiled kernel with f32 accumulator; K ragged edge masked
    in-kernel (no wrapper-side zero-padding of the operands)."""

    def kernel(msg_ref, w_ref, b_ref, out_ref, acc_ref):
        k = pl.program_id(2)

        @pl.when(k == 0)
        def _init():
            acc_ref[...] = jnp.zeros_like(acc_ref)

        msg = msg_ref[...]
        w = w_ref[...]
        if needs_k_mask:
            # Out-of-bounds input reads are NOT zero-filled by Pallas; mask the
            # ragged K edge so stale VMEM never enters the reduction.
            k0 = k * tile_k
            msg_col = jax.lax.broadcasted_iota(jnp.int32, msg.shape, 1) + k0
            w_row = jax.lax.broadcasted_iota(jnp.int32, w.shape, 0) + k0
            msg = jnp.where(msg_col < d_in, msg, 0.0)
            w = jnp.where(w_row < d_in, w, 0.0)

        acc_ref[...] += jnp.dot(
            msg.astype(compute_dtype),
            w.astype(compute_dtype),
            preferred_element_type=jnp.float32,
        )

        @pl.when(k == pl.num_programs(2) - 1)
        def _finalize():
            out_ref[...] = (acc_ref[...] + b_ref[...]).astype(out_ref.dtype)

    return kernel


# ----------------------------------------------------------------------------
# Wrapper (≡ ContinuousLinearReceiver.forward with a Linear agent)
# ----------------------------------------------------------------------------
def continuous_linear_receiver(message, weight_t, bias=None,
                               input=None, aux_input=None,
                               *, compute_dtype=jnp.bfloat16,
                               force_tiled=False):
    """message: (B, D_IN) f32; weight_t: (D_IN, D_OUT) (nn.Linear weight,
    transposed); bias: (D_OUT,) or (1, D_OUT) or None.
    `input`/`aux_input` are accepted for API parity and ignored, as a Linear
    agent would."""
    del input, aux_input  # TODO(synk): generic `agent` modules other than Linear are not translated.

    B, D_IN = message.shape
    D_OUT = weight_t.shape[1]
    out_dtype = message.dtype

    if bias is None:
        bias2d = jnp.zeros((1, D_OUT), jnp.float32)
    else:
        bias2d = jnp.reshape(bias, (1, D_OUT)).astype(jnp.float32)

    vmem_cap = _vmem_capacity_bytes()
    vmem_budget = int(vmem_cap * 0.75)          # leave compiler headroom

    tile_m = _pick_tile_m(B)

    cost = pl.CostEstimate(
        flops=2 * B * D_IN * D_OUT,
        transcendentals=0,
        bytes_accessed=(B * D_IN + D_IN * D_OUT + D_OUT + B * D_OUT) * 4,
    )

    # --- fused path footprint (f32 tiles, double-buffered by BlockSpec) -----
    fused_need = (2 * tile_m * D_IN * 4        # message tiles
                  + 2 * D_IN * D_OUT * 4       # weight (constant block index)
                  + 2 * D_OUT * 4              # bias
                  + 2 * tile_m * D_OUT * 4)    # output tiles

    if (not force_tiled) and fused_need <= vmem_budget:
        grid = (_cdiv(B, tile_m),)
        vmem_limit = int(min(max(fused_need + (4 << 20), 32 << 20), vmem_budget))
        return pl.pallas_call(
            functools.partial(_fused_kernel, compute_dtype=compute_dtype),
            out_shape=jax.ShapeDtypeStruct((B, D_OUT), out_dtype),
            grid_spec=pltpu.PrefetchScalarGridSpec(
                num_scalar_prefetch=0,
                grid=grid,
                in_specs=[
                    pl.BlockSpec((tile_m, D_IN), lambda i: (i, 0)),
                    pl.BlockSpec((D_IN, D_OUT), lambda i: (0, 0)),   # resident
                    pl.BlockSpec((1, D_OUT), lambda i: (0, 0)),
                ],
                out_specs=pl.BlockSpec((tile_m, D_OUT), lambda i: (i, 0)),
            ),
            compiler_params=pltpu.CompilerParams(
                dimension_semantics=("parallel",),
                vmem_limit_bytes=vmem_limit,
            ),
            cost_estimate=cost,
        )(message, weight_t, bias2d)

    # --- tiled fallback: (M, N, K) grid, f32 accumulator, K masked ----------
    tile_k = D_IN if D_IN <= 512 else 512       # multiple of 128 or full dim
    tile_n = D_OUT if D_OUT <= 512 else 512
    needs_k_mask = (D_IN % tile_k) != 0
    grid = (_cdiv(B, tile_m), _cdiv(D_OUT, tile_n), _cdiv(D_IN, tile_k))

    tiled_need = (2 * tile_m * tile_k * 4
                  + 2 * tile_k * tile_n * 4
                  + 2 * tile_n * 4
                  + 2 * tile_m * tile_n * 4
                  + tile_m * tile_n * 4)        # accumulator
    vmem_limit = int(min(max(tiled_need + (4 << 20), 32 << 20), vmem_budget))

    kernel = _make_tiled_kernel(D_IN, tile_k, compute_dtype, needs_k_mask)
    return pl.pallas_call(
        kernel,
        out_shape=jax.ShapeDtypeStruct((B, D_OUT), out_dtype),
        grid_spec=pltpu.PrefetchScalarGridSpec(
            num_scalar_prefetch=0,
            grid=grid,
            in_specs=[
                pl.BlockSpec((tile_m, tile_k), lambda i, j, k: (i, k)),
                pl.BlockSpec((tile_k, tile_n), lambda i, j, k: (k, j)),
                pl.BlockSpec((1, tile_n), lambda i, j, k: (0, j)),
            ],
            out_specs=pl.BlockSpec((tile_m, tile_n), lambda i, j, k: (i, j)),
            scratch_shapes=[pltpu.VMEM((tile_m, tile_n), jnp.float32)],
        ),
        compiler_params=pltpu.CompilerParams(
            dimension_semantics=("parallel", "parallel", "arbitrary"),
            vmem_limit_bytes=vmem_limit,
        ),
        cost_estimate=cost,
    )(message, weight_t, bias2d)


# ----------------------------------------------------------------------------
# Reference & tests
# ----------------------------------------------------------------------------
def _reference(message, weight_t, bias, compute_dtype):
    """Pure-JAX reference with the same in-kernel bf16 rounding of operands
    and f32 accumulation."""
    m = message.astype(compute_dtype).astype(jnp.float32)
    w = weight_t.astype(compute_dtype).astype(jnp.float32)
    out = m @ w
    if bias is not None:
        out = out + jnp.reshape(bias, (1, -1)).astype(jnp.float32)
    return out.astype(message.dtype)


if __name__ == "__main__":
    key = jax.random.PRNGKey(0)

    def make_case(k, B, D_IN, D_OUT):
        k_msg, k_w, k_b = jax.random.split(k, 3)
        message = jax.random.normal(k_msg, (B, D_IN), dtype=jnp.float32)
        # nn.Linear(D_IN, D_OUT): weight is (D_OUT, D_IN); we store its transpose.
        weight_t = (jax.random.normal(k_w, (D_IN, D_OUT), dtype=jnp.float32)
                    * (1.0 / jnp.sqrt(D_IN)))
        bias = jax.random.normal(k_b, (D_OUT,), dtype=jnp.float32) * 0.01
        return message, weight_t, bias

    k1, k2, k3 = jax.random.split(key, 3)

    # Case 1: small receiver shapes (fused path, single M block).
    msg1, w1, b1 = make_case(k1, B=8, D_IN=32, D_OUT=64)
    out1 = jax.block_until_ready(continuous_linear_receiver(msg1, w1, b1))
    ref1 = _reference(msg1, w1, b1, jnp.bfloat16)
    assert out1.shape == (8, 64)
    assert jnp.allclose(out1, ref1, atol=2e-3, rtol=2e-3)

    # Case 2: fused path with 2 parallel M blocks (weight resident in VMEM),
    # non-128-multiple D_OUT, no padding/slice anywhere.
    msg2, w2, b2 = make_case(k2, B=512, D_IN=1024, D_OUT=320)
    out2 = jax.block_until_ready(continuous_linear_receiver(msg2, w2, b2))
    ref2 = _reference(msg2, w2, b2, jnp.bfloat16)
    assert out2.shape == (512, 320)
    assert jnp.allclose(out2, ref2, atol=2e-3, rtol=2e-3)

    # Case 3: exercise the tiled fallback (M,N,K grid, f32 accumulator) with a
    # ragged K edge that is masked inside the kernel.
    msg3, w3, b3 = make_case(k3, B=128, D_IN=1100, D_OUT=384)
    out3 = jax.block_until_ready(
        continuous_linear_receiver(msg3, w3, b3, force_tiled=True))
    ref3 = _reference(msg3, w3, b3, jnp.bfloat16)
    assert out3.shape == (128, 384)
    assert jnp.allclose(out3, ref3, atol=3e-3, rtol=3e-3)

    print("KERNEL_OK")
</pallas_src>

<mosaic_0001>
module attributes {stable_mosaic.version = 11 : i64} {
  func.func @_fused_kernel(%arg0: i32, %arg1: memref<8x32xf32, #tpu.memory_space<vmem>>, %arg2: memref<32x64xf32, #tpu.memory_space<vmem>>, %arg3: memref<1x64xf32, #tpu.memory_space<vmem>>, %arg4: memref<8x64xf32, #tpu.memory_space<vmem>>) attributes {dimension_semantics = [#tpu.dimension_semantics<parallel>], iteration_bounds = array<i64: 1>, scalar_prefetch = 0 : i64, scratch_operands = 0 : i64, tpu.core_type = #tpu.core_type<tc>, window_params = [{transform_indices = @transform_0, window_bounds = array<i64: 8, 32>}, {pipeline_mode = #tpu.pipeline_mode<synchronous>, transform_indices = @transform_1, window_bounds = array<i64: 32, 64>}, {pipeline_mode = #tpu.pipeline_mode<synchronous>, transform_indices = @transform_2, window_bounds = array<i64: 1, 64>}, {transform_indices = @transform_3, window_bounds = array<i64: 8, 64>}]} {
    %c0 = arith.constant 0 : index
    %c0_0 = arith.constant 0 : index
    %0 = vector.load %arg1[%c0, %c0_0] : memref<8x32xf32, #tpu.memory_space<vmem>>, vector<8x32xf32>
    %1 = arith.truncf %0 : vector<8x32xf32> to vector<8x32xbf16>
    %c0_1 = arith.constant 0 : index
    %c0_2 = arith.constant 0 : index
    %2 = vector.load %arg2[%c0_1, %c0_2] : memref<32x64xf32, #tpu.memory_space<vmem>>, vector<32x64xf32>
    %3 = arith.truncf %2 : vector<32x64xf32> to vector<32x64xbf16>
    %cst = arith.constant dense<0.000000e+00> : vector<8x64xf32>
    %4 = tpu.matmul %1, %3, %cst {dimension_numbers = #tpu.dot_dimension_numbers<[1], [0], [0], [1], [0, 0, 1, 1], [], []>} : vector<8x32xbf16>, vector<32x64xbf16>, vector<8x64xf32> -> vector<8x64xf32>
    %c0_3 = arith.constant 0 : index
    %c0_4 = arith.constant 0 : index
    %5 = vector.load %arg3[%c0_3, %c0_4] : memref<1x64xf32, #tpu.memory_space<vmem>>, vector<1x64xf32>
    %6 = vector.broadcast %5 : vector<1x64xf32> to vector<8x64xf32>
    %7 = arith.addf %4, %6 : vector<8x64xf32>
    %c0_5 = arith.constant 0 : index
    %c0_6 = arith.constant 0 : index
    %8 = vector.load %arg4[%c0_5, %c0_6] : memref<8x64xf32, #tpu.memory_space<vmem>>, vector<8x64xf32>
    tpu.vector_store %arg4[%c0_5, %c0_6], %7 {strides = array<i32>} : memref<8x64xf32, #tpu.memory_space<vmem>>, vector<8x64xf32>,
    return
  }
  func.func @transform_0(%arg0: i32) -> (i32, i32) {
    %c0_i32 = arith.constant 0 : i32
    %c0_i32_0 = arith.constant 0 : i32
    return %arg0, %c0_i32 : i32, i32
  }
  func.func @transform_1(%arg0: i32) -> (i32, i32) {
    %c0_i32 = arith.constant 0 : i32
    %c0_i32_0 = arith.constant 0 : i32
    %c0_i32_1 = arith.constant 0 : i32
    return %c0_i32, %c0_i32_0 : i32, i32
  }
  func.func @transform_2(%arg0: i32) -> (i32, i32) {
    %c0_i32 = arith.constant 0 : i32
    %c0_i32_0 = arith.constant 0 : i32
    %c0_i32_1 = arith.constant 0 : i32
    return %c0_i32, %c0_i32_0 : i32, i32
  }
  func.func @transform_3(%arg0: i32) -> (i32, i32) {
    %c0_i32 = arith.constant 0 : i32
    %c0_i32_0 = arith.constant 0 : i32
    return %arg0, %c0_i32 : i32, i32
  }
}

</mosaic_0001>

<llo_original>
// kernel: tpu_custom_call.1
$region0: #{tpu_custom_call.1}
  #allocation0 [shape = 'u32[]', space=smem, size = 0x4, offset = 0x4, fixed_abs, tag = 'smem constant byte address 0x4 - core index']
  #allocation1 [shape = 'u32[144,128]{1,0:T(1,128)}', space=vmem, size = 0x12000, scoped, tag = 'internal scratch']
  %s0 = inlined_call_operand.hbm [shape: f32[8,32], index: 0, kind: input, shape index: {}]
  %s1 = inlined_call_operand.hbm [shape: f32[32,64], index: 1, kind: input, shape index: {}]
  %s2 = inlined_call_operand.vmem [shape: f32[1,64], index: 2, kind: input, shape index: {}]
  %s3 = inlined_call_operand.hbm [shape: f32[8,64], index: 3, kind: output, shape index: {}]
  %s4 = sld [smem:[#allocation0]]
  $region30: #{tpu_custom_call.1} parent=0
    _
  %s6 = ssub.s32 1, %s4
  %s7 = scalar_select 0, %s6, %s4
  $region1: #{tpu_custom_call.1} parent=0
    #allocation2 [shape = 'u8[4096]{0}', space=vmem, size = 0x1000, scoped, tag = 'input window, operand 0, single buffered']
    #allocation3 [shape = 's32[1]{0}', space=sflag, size = 0x4, scoped, tag = 'scoped memory for tpu_custom_call.1']
    #allocation4 [shape = 's32[1]{0}', space=sflag, size = 0x4, scoped, tag = 'scoped memory for tpu_custom_call.1']
    #allocation5 [shape = 'u8[16384]{0}', space=vmem, size = 0x4000, scoped, tag = 'input window, operand 1, single buffered']
    #allocation6 [shape = 's32[1]{0}', space=sflag, size = 0x4, scoped, tag = 'scoped memory for tpu_custom_call.1']
    #allocation7 [shape = 'u8[4096]{0}', space=vmem, size = 0x1000, scoped, tag = 'output window, operand 0, single buffered']
    %8 = vsyncpa [#allocation3], 0
    %9 = vsyncpa [#allocation6], 0
    %10 = vsyncpa [#allocation4], 0
    // Predicated region
    $region2: #{tpu_custom_call.1} parent=1 // pred_check
      _
    $region3: #{tpu_custom_call.1} parent=1 // pred_check_branch
      %12 = sbr.rel (0) target = $region5
    $region4: #{tpu_custom_call.1} parent=1 // pred_region
      %s14 = ssub.s32 128, 128
      %15 = vsyncadd [#allocation3], %s14
      %s17 = sshll.u32 [#allocation2], 4
      %s18 = int_to_ptr.vmem [resolvable:$true] %s17
      %20 = dma.hbm_to_vmem [thread:$0]  %s0, 128, %s18, [#allocation3]
    $region5: #{tpu_custom_call.1} parent=1 // pred_fallthru
      _
    // Predicated region
    $region6: #{tpu_custom_call.1} parent=1 // pred_check
      _
    $region7: #{tpu_custom_call.1} parent=1 // pred_check_branch
      %22 = sbr.rel (0) target = $region9
    $region8: #{tpu_custom_call.1} parent=1 // pred_region
      %s24 = ssub.s32 512, 512
      %25 = vsyncadd [#allocation6], %s24
      %s26 = sshll.u32 [#allocation5], 4
      %s27 = int_to_ptr.vmem [resolvable:$true] %s26
      %32 = dma.hbm_to_vmem [thread:$0]  %s1, 512, %s27, [#allocation6], 128, 128, 8
    $region9: #{tpu_custom_call.1} parent=1 // pred_fallthru
      _
    // Predicated region
    $region10: #{tpu_custom_call.1} parent=1 // pred_check
      _
    $region11: #{tpu_custom_call.1} parent=1 // pred_check_branch
      %34 = sbr.rel (0) target = $region13
    $region12: #{tpu_custom_call.1} parent=1 // pred_region
      _
    $region13: #{tpu_custom_call.1} parent=1 // pred_fallthru
      _
    // Predicated region
    $region14: #{tpu_custom_call.1} parent=1 // pred_check
      _
    $region15: #{tpu_custom_call.1} parent=1 // pred_check_branch
      %36 = sbr.rel (0) target = $region17
    $region16: #{tpu_custom_call.1} parent=1 // pred_region
      %37 = dma.done [#allocation3], 128
    $region17: #{tpu_custom_call.1} parent=1 // pred_fallthru
      _
    // Predicated region
    $region18: #{tpu_custom_call.1} parent=1 // pred_check
      _
    $region19: #{tpu_custom_call.1} parent=1 // pred_check_branch
      %39 = sbr.rel (0) target = $region21
    $region20: #{tpu_custom_call.1} parent=1 // pred_region
      %40 = dma.done [#allocation6], 512
    $region21: #{tpu_custom_call.1} parent=1 // pred_fallthru
      _
    %v42 = vld [vmem:[#allocation2] sm:$0xff]
    %v43 = vpack.c.bf16 %v42, %v42
    %v44 = vld [vmem:[#allocation5] sm:$0xff]
    %v45 = vld [vmem:[#allocation5 + $0x8] sm:$0xff]
    %v46 = vld [vmem:[#allocation5 + $0x10] sm:$0xff]
    %v47 = vld [vmem:[#allocation5 + $0x18] sm:$0xff]
    %v48 = vpack.c.bf16 %v45, %v44
    %v49 = vpack.c.bf16 %v47, %v46
    %v50 = vld [vmem:[%s2] sm:$0x1]
    %v52 = vlaneseq
    %v53 = vshrl.u32 %v52, 7
    %v54 = vsub.s32 0, %v53
    %v55 = vrot.slane %v50, %v54
    %vm57 = vcmask 261120
    %v59 = vsel %vm57, %v43, 0
    %61 = vmatprep.subr.bf16.mxu0 0
    %62 = vmatpush1.bf16.msra.mxu0 %v48
    %63 = vmatprep.subr.bf16.mxu0 0
    %64 = vmatpush1.bf16.msra.mxu0 %v49
    %65 = vmatprep.subr.bf16.mxu0 0
    %66 = vmatpush1.bf16.msra.mxu0 0
    %67 = vmatprep.subr.bf16.mxu0 0
    %68 = vmatpush1.bf16.msra.mxu0 0
    %69 = vmatprep.subr.bf16.mxu0 0
    %70 = vmatpush1.bf16.msra.mxu0 0
    %71 = vmatprep.subr.bf16.mxu0 0
    %72 = vmatpush1.bf16.msra.mxu0 0
    %73 = vmatprep.subr.bf16.mxu0 0
    %74 = vmatpush1.bf16.msra.mxu0 0
    %75 = vmatprep.subr.bf16.mxu0 0
    %76 = vmatpush1.bf16.msra.mxu0 0
    %77 = vmatprep.subr.bf16.mxu0 0
    %78 = vmatpush1.bf16.msra.mxu0 0
    %79 = vmatprep.subr.bf16.mxu0 0
    %80 = vmatpush1.bf16.msra.mxu0 0
    %81 = vmatprep.subr.bf16.mxu0 0
    %82 = vmatpush1.bf16.msra.mxu0 0
    %83 = vmatprep.subr.bf16.mxu0 0
    %84 = vmatpush1.bf16.msra.mxu0 0
    %85 = vmatprep.subr.bf16.mxu0 0
    %86 = vmatpush1.bf16.msra.mxu0 0
    %87 = vmatprep.subr.bf16.mxu0 0
    %88 = vmatpush1.bf16.msra.mxu0 0
    %89 = vmatprep.subr.bf16.mxu0 0
    %90 = vmatpush1.bf16.msra.mxu0 0
    %91 = vmatprep.subr.bf16.mxu0 0
    %92 = vmatpush1.bf16.msra.mxu0 0
    %93 = vmatprep.mubr.bf16.mxu0 0
    %94 = vmatmul.mubr.bf16.gmra.mrb[0].mxu0 %v59
    %v95 = vpop.f32.mrb[0].mxu0
    %v96 = vadd.f32 %v55, %v95
    %v97 = vpop.f32.mrb[0].mxu0
    %v98 = vpop.f32.mrb[0].mxu0
    %v99 = vpop.f32.mrb[0].mxu0
    %100 = vdwg.mxu0
    %vm101 = vcmask 523264
    %102 = vst.msk [vmem:[#allocation7] sm:$0xff] %vm101, %v96
    // Predicated region
    $region22: #{tpu_custom_call.1} parent=1 // pred_check
      _
    $region23: #{tpu_custom_call.1} parent=1 // pred_check_branch
      %104 = sbr.rel (0) target = $region25
    $region24: #{tpu_custom_call.1} parent=1 // pred_region
      %s106 = ssub.s32 128, 128
      %107 = vsyncadd [#allocation4], %s106
      %s109 = sshll.u32 [#allocation7], 4
      %s110 = int_to_ptr.vmem [resolvable:$true] %s109
      %112 = dma.vmem_to_hbm [thread:$0]  %s110, 128, %s3, [#allocation4]
    $region25: #{tpu_custom_call.1} parent=1 // pred_fallthru
      _
    // Predicated region
    $region26: #{tpu_custom_call.1} parent=1 // pred_check
      _
    $region27: #{tpu_custom_call.1} parent=1 // pred_check_branch
      %114 = sbr.rel (0) target = $region29
    $region28: #{tpu_custom_call.1} parent=1 // pred_region
      %115 = dma.done [#allocation4], 128
    $region29: #{tpu_custom_call.1} parent=1 // pred_fallthru
      _
    %116 = vsyncpa [#allocation3], 1
    %117 = vsyncpa [#allocation6], 1
    %118 = vsyncpa [#allocation4], 1

</llo_original>
